<compile_context>
chip_gen: v7x
topology: tpu7x:2x2x1
jax: 0.10.0
libtpu: 0.0.40
codegen_flags: <defaults>
</compile_context>

<pallas_src>
import jax
import jax.numpy as jnp
from jax.experimental import pallas as pl
from jax.experimental.pallas import tpu as pltpu


def _softmax_epilogue(z, out_ref):
    # Numerically stable softmax, kept in f32 on the VPU/EUP (v5e-safe).
    # Exact divide: kernel is memory-bound, so the extra VPU work is free.
    m = jnp.max(z, axis=-1, keepdims=True)
    e = jnp.exp(z - m)
    denom = jnp.sum(e, axis=-1, keepdims=True)
    out_ref[...] = (e / denom).astype(out_ref.dtype)


def _fused_kernel(x_ref, w_ref, out_ref):
    # x: (TILE_B, U) int8 multi-hot (0/1 -> bf16 cast is exact, done in VMEM)
    # w: (U, U) bf16 where W = K @ Q^T (folded once in f32 in the wrapper)
    x = x_ref[...].astype(jnp.bfloat16)
    z = jnp.dot(x, w_ref[...], preferred_element_type=jnp.float32)          # (TILE_B, U) f32
    _softmax_epilogue(z, out_ref)


def _two_matmul_kernel(x_ref, key_ref, qt_ref, out_ref):
    # Fallback for large U (when a U×U fused weight would be too big).
    # x:   (TILE_B, U) int8 multi-hot
    # key: (U, E)      bf16
    # qt:  (E, U)      bf16   (query pre-transposed in the wrapper; lane-dense)
    x = x_ref[...].astype(jnp.bfloat16)
    h = jnp.dot(x, key_ref[...], preferred_element_type=jnp.float32)        # (TILE_B, E) f32
    z = jnp.dot(h.astype(jnp.bfloat16), qt_ref[...],
                preferred_element_type=jnp.float32)                         # (TILE_B, U) f32
    _softmax_epilogue(z, out_ref)


def _choose_tile_b(B, tile_b):
    """Pick a batch tile: multiple of 32 (int8 sublane packing) when tiling,
    big enough to amortize per-step overhead, and preferring >=2 grid steps
    (so v7x's two TensorCores both get work) when the batch allows it."""
    tile_b = max(32, (tile_b // 32) * 32)
    if B <= tile_b:
        # Split evenly in two if both halves stay int8-tileable; else one block.
        if B >= 64 and B % 64 == 0:
            return B // 2
        return B
    return tile_b


def number_game_forward(given, key_weight, query_weight, *, fuse_weights=None,
                        tile_b=2048, out_dtype=jnp.float32):
    """given: (..., U) int/bool multi-hot; returns softmax probs (..., U).

    fuse_weights=None (default) auto-fuses W = K @ Q^T whenever the U×U bf16
    weight is small (<= 4 MiB); pass False to force the two-matmul path.
    out_dtype=jnp.bfloat16 halves output HBM traffic if acceptable downstream.
    """
    assert jnp.issubdtype(given.dtype, jnp.integer) or given.dtype == jnp.bool_, (
        "`given` must be an integer/bool multi-hot set indicator")

    leading = given.shape[:-1]
    U = given.shape[-1]
    Uk, E = key_weight.shape
    assert Uk == U and query_weight.shape == (U, E)

    if fuse_weights is None:
        fuse_weights = (U * U * 2) <= (4 * 1024 * 1024)   # U×U bf16 <= 4 MiB

    # int8 multi-hot input: 4x less DMA than int32; exact bf16 cast in-kernel.
    x = given.reshape(-1, U).astype(jnp.int8)
    B = x.shape[0]

    TILE_B = _choose_tile_b(B, tile_b)
    grid = (pl.cdiv(B, TILE_B),)

    x_spec = pl.BlockSpec((TILE_B, U), lambda i: (i, 0))
    out_spec = pl.BlockSpec((TILE_B, U), lambda i: (i, 0))

    if fuse_weights:
        # One-time (trace-time) weight fold in f32, quantized to bf16 once.
        w = jnp.dot(key_weight.astype(jnp.float32),
                    query_weight.astype(jnp.float32).T).astype(jnp.bfloat16)   # (U, U)
        kernel = _fused_kernel
        weight_args = (w,)
        weight_specs = [pl.BlockSpec((U, U), lambda i: (0, 0))]
        flops = 2 * B * U * U
    else:
        key_bf16 = key_weight.astype(jnp.bfloat16)                             # (U, E)
        qt_bf16 = query_weight.T.astype(jnp.bfloat16)                          # (E, U)
        kernel = _two_matmul_kernel
        weight_args = (key_bf16, qt_bf16)
        weight_specs = [pl.BlockSpec((U, E), lambda i: (0, 0)),
                        pl.BlockSpec((E, U), lambda i: (0, 0))]
        flops = 4 * B * U * E

    out_itemsize = jnp.dtype(out_dtype).itemsize
    weight_bytes = sum(int(w.size) * w.dtype.itemsize for w in weight_args)

    # True HBM traffic: x once, weights once (resident), output once.
    cost = pl.CostEstimate(
        flops=flops,
        transcendentals=B * U,
        bytes_accessed=B * U * 1 + weight_bytes + B * U * out_itemsize)

    # Only raise the scoped-VMEM limit when very large tiles would trip the
    # 32 MiB default (relevant on v7x's 64 MiB VMEM); small tiles leave it alone.
    vmem_est = (2 * TILE_B * U * 1                 # x, double-buffered
                + 2 * TILE_B * U * out_itemsize    # out, double-buffered
                + weight_bytes
                + 4 * TILE_B * U * 4)              # f32 softmax temporaries
    vmem_limit = None
    if vmem_est > 28 * 1024 * 1024:
        vmem_limit = min(vmem_est + (8 << 20), 62 << 20)

    out = pl.pallas_call(
        kernel,
        out_shape=jax.ShapeDtypeStruct((B, U), out_dtype),
        grid=grid,
        in_specs=[x_spec] + weight_specs,
        out_specs=out_spec,
        compiler_params=pltpu.CompilerParams(
            dimension_semantics=("parallel",),     # v7x: both TCs split the batch
            vmem_limit_bytes=vmem_limit),
        cost_estimate=cost,
    )(x, *weight_args)

    return out.reshape(leading + (U,))


if __name__ == "__main__":
    # Small shapes consistent with the module.
    universe_size = 128
    embedding_dim = 32
    batch_dims = (2, 4)   # exercises the '...i' leading-batch flattening

    root = jax.random.PRNGKey(0)
    k_key, k_query, k_given = jax.random.split(root, 3)

    # Trained-embedding-like scale; keeps bf16 MXU quantization well within the
    # test tolerance (the kernel itself is scale-agnostic).
    key_weight = 0.1 * jax.random.normal(k_key, (universe_size, embedding_dim), jnp.float32)
    query_weight = 0.1 * jax.random.normal(k_query, (universe_size, embedding_dim), jnp.float32)

    # `given` is a multi-hot set indicator over the universe (LongTensor in torch);
    # carried as int8 end-to-end (0/1 values, so every cast is exact).
    given = jax.random.bernoulli(
        k_given, p=0.1, shape=batch_dims + (universe_size,)).astype(jnp.int8)

    # Default (fused, single lane-dense matmul) path.
    out = jax.block_until_ready(number_game_forward(given, key_weight, query_weight))
    # Two-matmul fallback path (kept for very large U); exercised for coverage.
    out_two = jax.block_until_ready(
        number_game_forward(given, key_weight, query_weight, fuse_weights=False))

    # Pure-JAX f32 reference.
    z_ref = jnp.einsum('...i,iz,jz->...j',
                       given.astype(jnp.float32), key_weight, query_weight)
    ref = jax.nn.softmax(z_ref, axis=-1)

    assert out.shape == batch_dims + (universe_size,)
    # bf16 MXU quantization of the weights -> slightly looser tolerance than pure f32.
    assert jnp.allclose(out, ref, atol=1e-3, rtol=5e-2)
    assert jnp.allclose(out_two, ref, atol=1e-3, rtol=5e-2)
    # Exact softmax divide: rows normalize to f32 precision.
    assert jnp.allclose(jnp.sum(out, axis=-1), 1.0, atol=1e-5)
    assert jnp.allclose(jnp.sum(out_two, axis=-1), 1.0, atol=1e-5)

    print("KERNEL_OK")
</pallas_src>

<mosaic_0001>
module attributes {stable_mosaic.version = 11 : i64} {
  func.func @_fused_kernel(%arg0: i32, %arg1: memref<8x128xi8, #tpu.memory_space<vmem>>, %arg2: memref<128x128xbf16, #tpu.memory_space<vmem>>, %arg3: memref<8x128xf32, #tpu.memory_space<vmem>>) attributes {dimension_semantics = [#tpu.dimension_semantics<parallel>], iteration_bounds = array<i64: 1>, scalar_prefetch = 0 : i64, scratch_operands = 0 : i64, tpu.core_type = #tpu.core_type<tc>, window_params = [{transform_indices = @transform_0, window_bounds = array<i64: 8, 128>}, {pipeline_mode = #tpu.pipeline_mode<synchronous>, transform_indices = @transform_1, window_bounds = array<i64: 128, 128>}, {transform_indices = @transform_2, window_bounds = array<i64: 8, 128>}]} {
    %c0 = arith.constant 0 : index
    %c0_0 = arith.constant 0 : index
    %0 = vector.load %arg1[%c0, %c0_0] : memref<8x128xi8, #tpu.memory_space<vmem>>, vector<8x128xi8>
    %1 = arith.sitofp %0 : vector<8x128xi8> to vector<8x128xbf16>
    %c0_1 = arith.constant 0 : index
    %c0_2 = arith.constant 0 : index
    %2 = vector.load %arg2[%c0_1, %c0_2] : memref<128x128xbf16, #tpu.memory_space<vmem>>, vector<128x128xbf16>
    %cst = arith.constant dense<0.000000e+00> : vector<8x128xf32>
    %3 = tpu.matmul %1, %2, %cst {dimension_numbers = #tpu.dot_dimension_numbers<[1], [0], [0], [1], [0, 0, 1, 1], [], []>} : vector<8x128xbf16>, vector<128x128xbf16>, vector<8x128xf32> -> vector<8x128xf32>
    %cst_3 = arith.constant dense<0xFF800000> : vector<8xf32>
    %4 = vector.multi_reduction <maximumf>, %3, %cst_3 [1] : vector<8x128xf32> to vector<8xf32>
    %5 = vector.shape_cast %4 : vector<8xf32> to vector<8x1xf32>
    %6 = vector.broadcast %5 : vector<8x1xf32> to vector<8x128xf32>
    %7 = arith.subf %3, %6 : vector<8x128xf32>
    %8 = math.exp %7 : vector<8x128xf32>
    %cst_4 = arith.constant dense<0.000000e+00> : vector<8xf32>
    %9 = vector.multi_reduction <add>, %8, %cst_4 [1] : vector<8x128xf32> to vector<8xf32>
    %10 = vector.shape_cast %9 : vector<8xf32> to vector<8x1xf32>
    %11 = vector.broadcast %10 : vector<8x1xf32> to vector<8x128xf32>
    %12 = arith.divf %8, %11 : vector<8x128xf32>
    %c0_5 = arith.constant 0 : index
    %c0_6 = arith.constant 0 : index
    %13 = vector.load %arg3[%c0_5, %c0_6] : memref<8x128xf32, #tpu.memory_space<vmem>>, vector<8x128xf32>
    tpu.vector_store %arg3[%c0_5, %c0_6], %12 {strides = array<i32>} : memref<8x128xf32, #tpu.memory_space<vmem>>, vector<8x128xf32>,
    return
  }
  func.func @transform_0(%arg0: i32) -> (i32, i32) {
    %c0_i32 = arith.constant 0 : i32
    %c0_i32_0 = arith.constant 0 : i32
    return %arg0, %c0_i32 : i32, i32
  }
  func.func @transform_1(%arg0: i32) -> (i32, i32) {
    %c0_i32 = arith.constant 0 : i32
    %c0_i32_0 = arith.constant 0 : i32
    %c0_i32_1 = arith.constant 0 : i32
    return %c0_i32, %c0_i32_0 : i32, i32
  }
  func.func @transform_2(%arg0: i32) -> (i32, i32) {
    %c0_i32 = arith.constant 0 : i32
    %c0_i32_0 = arith.constant 0 : i32
    return %arg0, %c0_i32 : i32, i32
  }
}

</mosaic_0001>

<llo_original>
// kernel: tpu_custom_call.1
$region0: #{tpu_custom_call.1}
  #allocation0 [shape = 'u32[]', space=smem, size = 0x4, offset = 0x4, fixed_abs, tag = 'smem constant byte address 0x4 - core index']
  #allocation1 [shape = 'u32[144,128]{1,0:T(1,128)}', space=vmem, size = 0x12000, scoped, tag = 'internal scratch']
  %s0 = inlined_call_operand.hbm [shape: s8[8,128], index: 0, kind: input, shape index: {}]
  %s1 = inlined_call_operand.hbm [shape: bf16[128,128], index: 1, kind: input, shape index: {}]
  %s2 = inlined_call_operand.hbm [shape: f32[8,128], index: 2, kind: output, shape index: {}]
  %s3 = sld [smem:[#allocation0]]
  $region26: #{tpu_custom_call.1} parent=0
    _
  %s5 = ssub.s32 1, %s3
  %s6 = scalar_select 0, %s5, %s3
  $region1: #{tpu_custom_call.1} parent=0
    #allocation2 [shape = 'u8[1024]{0}', space=vmem, size = 0x400, scoped, tag = 'input window, operand 0, single buffered']
    #allocation3 [shape = 's32[1]{0}', space=sflag, size = 0x4, scoped, tag = 'scoped memory for tpu_custom_call.1']
    #allocation4 [shape = 's32[1]{0}', space=sflag, size = 0x4, scoped, tag = 'scoped memory for tpu_custom_call.1']
    #allocation5 [shape = 'u8[32768]{0}', space=vmem, size = 0x8000, scoped, tag = 'input window, operand 1, single buffered']
    #allocation6 [shape = 's32[1]{0}', space=sflag, size = 0x4, scoped, tag = 'scoped memory for tpu_custom_call.1']
    #allocation7 [shape = 'u8[4096]{0}', space=vmem, size = 0x1000, scoped, tag = 'output window, operand 0, single buffered']
    %7 = vsyncpa [#allocation3], 0
    %8 = vsyncpa [#allocation6], 0
    %9 = vsyncpa [#allocation4], 0
    // Predicated region
    $region2: #{tpu_custom_call.1} parent=1 // pred_check
      _
    $region3: #{tpu_custom_call.1} parent=1 // pred_check_branch
      %11 = sbr.rel (0) target = $region5
    $region4: #{tpu_custom_call.1} parent=1 // pred_region
      %s13 = ssub.s32 32, 32
      %14 = vsyncadd [#allocation3], %s13
      %s16 = sshll.u32 [#allocation2], 4
      %s17 = int_to_ptr.vmem [resolvable:$true] %s16
      %19 = dma.hbm_to_vmem [thread:$0]  %s0, 32, %s17, [#allocation3]
    $region5: #{tpu_custom_call.1} parent=1 // pred_fallthru
      _
    // Predicated region
    $region6: #{tpu_custom_call.1} parent=1 // pred_check
      _
    $region7: #{tpu_custom_call.1} parent=1 // pred_check_branch
      %21 = sbr.rel (0) target = $region9
    $region8: #{tpu_custom_call.1} parent=1 // pred_region
      %s23 = ssub.s32 1024, 1024
      %24 = vsyncadd [#allocation6], %s23
      %s25 = sshll.u32 [#allocation5], 4
      %s26 = int_to_ptr.vmem [resolvable:$true] %s25
      %31 = dma.hbm_to_vmem [thread:$0]  %s1, 1024, %s26, [#allocation6], 64, 64, 4
    $region9: #{tpu_custom_call.1} parent=1 // pred_fallthru
      _
    // Predicated region
    $region10: #{tpu_custom_call.1} parent=1 // pred_check
      _
    $region11: #{tpu_custom_call.1} parent=1 // pred_check_branch
      %33 = sbr.rel (0) target = $region13
    $region12: #{tpu_custom_call.1} parent=1 // pred_region
      %34 = dma.done [#allocation3], 32
    $region13: #{tpu_custom_call.1} parent=1 // pred_fallthru
      _
    // Predicated region
    $region14: #{tpu_custom_call.1} parent=1 // pred_check
      _
    $region15: #{tpu_custom_call.1} parent=1 // pred_check_branch
      %36 = sbr.rel (0) target = $region17
    $region16: #{tpu_custom_call.1} parent=1 // pred_region
      %37 = dma.done [#allocation6], 1024
    $region17: #{tpu_custom_call.1} parent=1 // pred_fallthru
      _
    %v39 = vld [vmem:[#allocation2] sm:$0x3]
    %v40 = vunpack.c.l.s8.bf16 %v39
    %v41 = vld [vmem:[#allocation5] sm:$0xf]
    %v42 = vld [vmem:[#allocation5 + $0x4] sm:$0xf]
    %v43 = vld [vmem:[#allocation5 + $0x8] sm:$0xf]
    %v44 = vld [vmem:[#allocation5 + $0xc] sm:$0xf]
    %v45 = vld [vmem:[#allocation5 + $0x10] sm:$0xf]
    %v46 = vld [vmem:[#allocation5 + $0x14] sm:$0xf]
    %v47 = vld [vmem:[#allocation5 + $0x18] sm:$0xf]
    %v48 = vld [vmem:[#allocation5 + $0x1c] sm:$0xf]
    %v49 = vld [vmem:[#allocation5 + $0x20] sm:$0xf]
    %v50 = vld [vmem:[#allocation5 + $0x24] sm:$0xf]
    %v51 = vld [vmem:[#allocation5 + $0x28] sm:$0xf]
    %v52 = vld [vmem:[#allocation5 + $0x2c] sm:$0xf]
    %v53 = vld [vmem:[#allocation5 + $0x30] sm:$0xf]
    %v54 = vld [vmem:[#allocation5 + $0x34] sm:$0xf]
    %v55 = vld [vmem:[#allocation5 + $0x38] sm:$0xf]
    %v56 = vld [vmem:[#allocation5 + $0x3c] sm:$0xf]
    %v73 = vunpack.c.l.b16 %v41
    %v74 = vunpack.c.l.b16 %v42
    %v75 = vunpack.c.l.b16 %v43
    %v76 = vunpack.c.l.b16 %v44
    %v77 = vunpack.c.l.b16 %v45
    %v78 = vunpack.c.l.b16 %v46
    %v79 = vunpack.c.l.b16 %v47
    %v80 = vunpack.c.l.b16 %v48
    %v81 = vunpack.c.l.b16 %v49
    %v82 = vunpack.c.l.b16 %v50
    %v83 = vunpack.c.l.b16 %v51
    %v84 = vunpack.c.l.b16 %v52
    %v85 = vunpack.c.l.b16 %v53
    %v86 = vunpack.c.l.b16 %v54
    %v87 = vunpack.c.l.b16 %v55
    %v88 = vunpack.c.l.b16 %v56
    %v89 = vpack.c.b16 %v74, %v73
    %v90 = vpack.c.b16 %v76, %v75
    %v91 = vpack.c.b16 %v78, %v77
    %v92 = vpack.c.b16 %v80, %v79
    %v93 = vpack.c.b16 %v82, %v81
    %v94 = vpack.c.b16 %v84, %v83
    %v95 = vpack.c.b16 %v86, %v85
    %v96 = vpack.c.b16 %v88, %v87
    %105 = vmatprep.subr.bf16.mxu0 0
    %106 = vmatpush1.bf16.msra.mxu0 %v89
    %107 = vmatprep.subr.bf16.mxu0 0
    %108 = vmatpush1.bf16.msra.mxu0 %v90
    %109 = vmatprep.subr.bf16.mxu0 0
    %110 = vmatpush1.bf16.msra.mxu0 %v91
    %111 = vmatprep.subr.bf16.mxu0 0
    %112 = vmatpush1.bf16.msra.mxu0 %v92
    %113 = vmatprep.subr.bf16.mxu0 0
    %114 = vmatpush1.bf16.msra.mxu0 %v93
    %115 = vmatprep.subr.bf16.mxu0 0
    %116 = vmatpush1.bf16.msra.mxu0 %v94
    %117 = vmatprep.subr.bf16.mxu0 0
    %118 = vmatpush1.bf16.msra.mxu0 %v95
    %119 = vmatprep.subr.bf16.mxu0 0
    %120 = vmatpush1.bf16.msra.mxu0 %v96
    %121 = vmatprep.subr.bf16.mxu0 0
    %122 = vmatpush1.bf16.msra.mxu0 0
    %123 = vmatprep.subr.bf16.mxu0 0
    %124 = vmatpush1.bf16.msra.mxu0 0
    %125 = vmatprep.subr.bf16.mxu0 0
    %126 = vmatpush1.bf16.msra.mxu0 0
    %127 = vmatprep.subr.bf16.mxu0 0
    %128 = vmatpush1.bf16.msra.mxu0 0
    %129 = vmatprep.subr.bf16.mxu0 0
    %130 = vmatpush1.bf16.msra.mxu0 0
    %131 = vmatprep.subr.bf16.mxu0 0
    %132 = vmatpush1.bf16.msra.mxu0 0
    %133 = vmatprep.subr.bf16.mxu0 0
    %134 = vmatpush1.bf16.msra.mxu0 0
    %135 = vmatprep.subr.bf16.mxu0 0
    %136 = vmatpush1.bf16.msra.mxu0 0
    %137 = vmatprep.mubr.bf16.mxu0 0
    %138 = vmatmul.mubr.bf16.gmra.mrb[0].mxu0 %v40
    %v139 = vpop.f32.mrb[0].mxu0
    %v140 = vadd.f32 0.0, %v139
    %v141 = vpop.f32.mrb[0].mxu0
    %v142 = vpop.f32.mrb[0].mxu0
    %v143 = vpop.f32.mrb[0].mxu0
    %144 = vdwg.mxu0
    %145 = vmax.xlane.f32.xlu0 %v140
    %v146 = vpop.xlane.xlu0 %145
    %v147 = vsub.f32 %v140, %v146
    %v148 = vmul.f32 %v147, 1.442695
    %v149 = vpow.pop %v148
    %150 = vadd.xlane.f32.xlu0 %v149
    %v151 = vpop.xlane.xlu0 %150
    %v152 = vrcp.pop %v151
    %v153 = vmul.f32 %v149, %v152
    %154 = vst [vmem:[#allocation7] sm:$0xff] %v153
    // Predicated region
    $region18: #{tpu_custom_call.1} parent=1 // pred_check
      _
    $region19: #{tpu_custom_call.1} parent=1 // pred_check_branch
      %156 = sbr.rel (0) target = $region21
    $region20: #{tpu_custom_call.1} parent=1 // pred_region
      %s158 = ssub.s32 128, 128
      %159 = vsyncadd [#allocation4], %s158
      %s161 = sshll.u32 [#allocation7], 4
      %s162 = int_to_ptr.vmem [resolvable:$true] %s161
      %164 = dma.vmem_to_hbm [thread:$0]  %s162, 128, %s2, [#allocation4]
    $region21: #{tpu_custom_call.1} parent=1 // pred_fallthru
      _
    // Predicated region
    $region22: #{tpu_custom_call.1} parent=1 // pred_check
      _
    $region23: #{tpu_custom_call.1} parent=1 // pred_check_branch
      %166 = sbr.rel (0) target = $region25
    $region24: #{tpu_custom_call.1} parent=1 // pred_region
      %167 = dma.done [#allocation4], 128
    $region25: #{tpu_custom_call.1} parent=1 // pred_fallthru
      _
    %168 = vsyncpa [#allocation3], 1
    %169 = vsyncpa [#allocation6], 1
    %170 = vsyncpa [#allocation4], 1

</llo_original>
